<compile_context>
chip_gen: v5e
topology: v5e:2x2
jax: 0.10.0
libtpu: 0.0.40
codegen_flags: <defaults>
</compile_context>

<pallas_src>
import functools

import jax
import jax.numpy as jnp
from jax.experimental import pallas as pl
from jax.experimental.pallas import tpu as pltpu


def _round_up(x, m):
    return ((x + m - 1) // m) * m


def _pick_tile(total, target, quantum=128):
    """Largest multiple of `quantum` that divides `total` and is <= target."""
    best = None
    t = quantum
    while t <= min(target, total):
        if total % t == 0:
            best = t
        t += quantum
    return best if best is not None else total


# ---------------------------------------------------------------------------
# Kernel 1: tiled GEMM + bias  (used for the qkv and proj projections)
# ---------------------------------------------------------------------------
def _linear_kernel(x_ref, w_ref, b_ref, o_ref):
    # x_ref: (tm, Kp), w_ref: (Kp, tn), b_ref: (1, tn), o_ref: (tm, tn)
    acc = jnp.dot(x_ref[...], w_ref[...], preferred_element_type=jnp.float32)
    o_ref[...] = (acc + b_ref[...]).astype(o_ref.dtype)


def linear_pallas(x2d, w, b, *, tm_target=256, tn_target=512):
    """x2d: (M, K); w: (K, D); b: (D,)  ->  (M, D) = x2d @ w + b."""
    M, K = x2d.shape
    D = w.shape[1]

    # Zero-pad lane dims to multiples of 128 (numerically exact), M to the tile.
    Kp = _round_up(K, 128)
    Dp = _round_up(D, 128)
    tm = min(tm_target, _round_up(M, 8))
    Mp = _round_up(M, tm)
    tn = _pick_tile(Dp, tn_target)

    xp = x2d if (Mp, Kp) == (M, K) else (
        jnp.zeros((Mp, Kp), x2d.dtype).at[:M, :K].set(x2d))
    wp = w if (Kp, Dp) == (K, D) else (
        jnp.zeros((Kp, Dp), w.dtype).at[:K, :D].set(w))
    bp = jnp.zeros((1, Dp), b.dtype).at[0, :D].set(b)

    grid = (Mp // tm, Dp // tn)
    cost = pl.CostEstimate(
        flops=2 * Mp * Kp * Dp,
        transcendentals=0,
        bytes_accessed=(Mp * Kp + Kp * Dp + Mp * Dp) * xp.dtype.itemsize,
    )

    out = pl.pallas_call(
        _linear_kernel,
        out_shape=jax.ShapeDtypeStruct((Mp, Dp), x2d.dtype),
        grid_spec=pltpu.PrefetchScalarGridSpec(
            num_scalar_prefetch=0,
            grid=grid,
            in_specs=[
                pl.BlockSpec((tm, Kp), lambda i, j: (i, 0)),
                pl.BlockSpec((Kp, tn), lambda i, j: (0, j)),
                pl.BlockSpec((1, tn), lambda i, j: (0, j)),
            ],
            out_specs=pl.BlockSpec((tm, tn), lambda i, j: (i, j)),
        ),
        compiler_params=pltpu.CompilerParams(
            dimension_semantics=("parallel", "parallel")),
        cost_estimate=cost,
    )(xp, wp, bp)

    return out[:M, :D]


# ---------------------------------------------------------------------------
# Kernel 2: fused scores -> softmax -> context per (batch*head, query tile)
# ---------------------------------------------------------------------------
def _attn_core_kernel(q_ref, k_ref, v_ref, attn_ref, ctx_ref, *, scale):
    # q_ref: (1, tq, hd); k_ref/v_ref: (1, Nk, hd)
    q = q_ref[0]
    k = k_ref[0]
    v = v_ref[0]

    # scores = q @ k^T  (contraction over head_dim, f32 accumulation on the MXU)
    s = jax.lax.dot_general(
        q, k, (((1,), (1,)), ((), ())),
        preferred_element_type=jnp.float32) * scale          # (tq, Nk)

    # numerically-stable softmax along keys
    m = jnp.max(s, axis=-1, keepdims=True)
    p = jnp.exp(s - m)
    denom = jnp.sum(p, axis=-1, keepdims=True)
    attn = p / denom                                          # (tq, Nk) f32
    attn_ref[0] = attn.astype(attn_ref.dtype)

    ctx = jnp.dot(attn.astype(v.dtype), v,
                  preferred_element_type=jnp.float32)         # (tq, hd)
    ctx_ref[0] = ctx.astype(ctx_ref.dtype)


def attention_core(q, k, v, scale, *, tq_target=256):
    """q, k, v: (B, H, N, hd)  ->  (ctx (B,H,N,hd), attn (B,H,N,N))."""
    B, H, N, hd = q.shape
    BH = B * H
    qf = q.reshape(BH, N, hd)
    kf = k.reshape(BH, N, hd)
    vf = v.reshape(BH, N, hd)

    tq = min(tq_target, _round_up(N, 8))
    Np = _round_up(N, tq)
    if Np != N:
        qf = jnp.zeros((BH, Np, hd), qf.dtype).at[:, :N, :].set(qf)

    grid = (BH, Np // tq)
    cost = pl.CostEstimate(
        flops=4 * BH * Np * N * hd,
        transcendentals=BH * Np * N,
        bytes_accessed=4 * (2 * BH * Np * hd + 2 * BH * N * hd + BH * Np * N),
    )

    kernel = functools.partial(_attn_core_kernel, scale=scale)
    attn_p, ctx_p = pl.pallas_call(
        kernel,
        out_shape=(
            jax.ShapeDtypeStruct((BH, Np, N), jnp.float32),
            jax.ShapeDtypeStruct((BH, Np, hd), q.dtype),
        ),
        grid_spec=pltpu.PrefetchScalarGridSpec(
            num_scalar_prefetch=0,
            grid=grid,
            in_specs=[
                pl.BlockSpec((1, tq, hd), lambda b, i: (b, i, 0)),
                pl.BlockSpec((1, N, hd), lambda b, i: (b, 0, 0)),
                pl.BlockSpec((1, N, hd), lambda b, i: (b, 0, 0)),
            ],
            out_specs=(
                pl.BlockSpec((1, tq, N), lambda b, i: (b, i, 0)),
                pl.BlockSpec((1, tq, hd), lambda b, i: (b, i, 0)),
            ),
        ),
        compiler_params=pltpu.CompilerParams(
            dimension_semantics=("parallel", "parallel")),
        cost_estimate=cost,
    )(qf, kf, vf)

    attn = attn_p[:, :N, :].reshape(B, H, N, N)
    ctx = ctx_p[:, :N, :].reshape(B, H, N, hd)
    return ctx, attn


# ---------------------------------------------------------------------------
# Full forward (mirrors Attention.forward, returning (x, attn, q, k))
# ---------------------------------------------------------------------------
def attention_forward(x, w_qkv, b_qkv, w_proj, b_proj, num_heads, qk_scale=None):
    """x: (B, N, C); w_qkv: (C, 3C); b_qkv: (3C,); w_proj: (C, C); b_proj: (C,)."""
    B, N, C = x.shape
    H = num_heads
    hd = C // H
    scale = qk_scale if qk_scale is not None else hd ** (-0.5)

    # qkv projection (Pallas tiled GEMM + bias)
    qkv = linear_pallas(x.reshape(B * N, C), w_qkv, b_qkv)       # (B*N, 3C)
    qkv = qkv.reshape(B, N, 3, H, hd)
    qkv = jnp.transpose(qkv, (2, 0, 3, 1, 4))                    # (3, B, H, N, hd)
    q, k, v = qkv[0], qkv[1], qkv[2]

    # fused attention core (Pallas)
    ctx, attn = attention_core(q, k, v, scale)                   # (B,H,N,hd), (B,H,N,N)
    # TODO(synk): attn_drop / proj_drop are identities (p=0.0, eval mode) and are omitted.

    # output projection (Pallas tiled GEMM + bias)
    ctx2d = jnp.transpose(ctx, (0, 2, 1, 3)).reshape(B * N, C)
    out = linear_pallas(ctx2d, w_proj, b_proj).reshape(B, N, C)

    return out, attn, q, k


# ---------------------------------------------------------------------------
# Pure-JAX reference (matches the PyTorch module in eval mode)
# ---------------------------------------------------------------------------
def reference_attention(x, w_qkv, b_qkv, w_proj, b_proj, num_heads, qk_scale=None):
    B, N, C = x.shape
    H = num_heads
    hd = C // H
    scale = qk_scale if qk_scale is not None else hd ** (-0.5)
    hp = jax.lax.Precision.HIGHEST

    qkv = jnp.einsum("bnc,cd->bnd", x, w_qkv, precision=hp) + b_qkv
    qkv = jnp.transpose(qkv.reshape(B, N, 3, H, hd), (2, 0, 3, 1, 4))
    q, k, v = qkv[0], qkv[1], qkv[2]
    attn = jnp.einsum("bhqd,bhkd->bhqk", q, k, precision=hp) * scale
    attn = jax.nn.softmax(attn, axis=-1)
    ctx = jnp.einsum("bhqk,bhkd->bhqd", attn, v, precision=hp)
    ctx = jnp.transpose(ctx, (0, 2, 1, 3)).reshape(B, N, C)
    out = jnp.einsum("bnc,cd->bnd", ctx, w_proj, precision=hp) + b_proj
    return out, attn, q, k


if __name__ == "__main__":
    # Small shapes consistent with the module: B=2, seq N=16, dim C=32, 4 heads.
    B, N, C = 2, 16, 32
    num_heads = 4
    head_dim = C // num_heads

    key = jax.random.PRNGKey(0)
    kx, k1, k2, k3, k4 = jax.random.split(key, 5)
    x = jax.random.normal(kx, (B, N, C), dtype=jnp.float32)
    w_qkv = jax.random.normal(k1, (C, 3 * C), dtype=jnp.float32) * 0.05
    b_qkv = jax.random.normal(k2, (3 * C,), dtype=jnp.float32) * 0.05
    w_proj = jax.random.normal(k3, (C, C), dtype=jnp.float32) * 0.05
    b_proj = jax.random.normal(k4, (C,), dtype=jnp.float32) * 0.05

    out, attn, q, k = attention_forward(x, w_qkv, b_qkv, w_proj, b_proj,
                                        num_heads=num_heads)
    out, attn, q, k = jax.block_until_ready((out, attn, q, k))

    ref_out, ref_attn, ref_q, ref_k = reference_attention(
        x, w_qkv, b_qkv, w_proj, b_proj, num_heads=num_heads)

    assert out.shape == (B, N, C)
    assert attn.shape == (B, num_heads, N, N)
    assert q.shape == (B, num_heads, N, head_dim)
    assert k.shape == (B, num_heads, N, head_dim)

    for name, got, ref in (("out", out, ref_out), ("attn", attn, ref_attn),
                           ("q", q, ref_q), ("k", k, ref_k)):
        err = float(jnp.max(jnp.abs(got - ref)))
        assert jnp.allclose(got, ref, atol=2e-3, rtol=2e-2), (name, err)

    print("KERNEL_OK")
</pallas_src>

<mosaic_0001>
module attributes {stable_mosaic.version = 11 : i64} {
  func.func @_linear_kernel(%arg0: i32, %arg1: i32, %arg2: memref<32x128xf32, #tpu.memory_space<vmem>>, %arg3: memref<128x128xf32, #tpu.memory_space<vmem>>, %arg4: memref<1x128xf32, #tpu.memory_space<vmem>>, %arg5: memref<32x128xf32, #tpu.memory_space<vmem>>) attributes {dimension_semantics = [#tpu.dimension_semantics<parallel>, #tpu.dimension_semantics<parallel>], iteration_bounds = array<i64: 1, 1>, scalar_prefetch = 0 : i64, scratch_operands = 0 : i64, tpu.core_type = #tpu.core_type<tc>, window_params = [{transform_indices = @transform_0, window_bounds = array<i64: 32, 128>}, {transform_indices = @transform_1, window_bounds = array<i64: 128, 128>}, {transform_indices = @transform_2, window_bounds = array<i64: 1, 128>}, {transform_indices = @transform_3, window_bounds = array<i64: 32, 128>}]} {
    %c0 = arith.constant 0 : index
    %c0_0 = arith.constant 0 : index
    %0 = vector.load %arg2[%c0, %c0_0] : memref<32x128xf32, #tpu.memory_space<vmem>>, vector<32x128xf32>
    %c0_1 = arith.constant 0 : index
    %c0_2 = arith.constant 0 : index
    %1 = vector.load %arg3[%c0_1, %c0_2] : memref<128x128xf32, #tpu.memory_space<vmem>>, vector<128x128xf32>
    %cst = arith.constant dense<0.000000e+00> : vector<32x128xf32>
    %2 = tpu.matmul %0, %1, %cst {dimension_numbers = #tpu.dot_dimension_numbers<[1], [0], [0], [1], [0, 0, 1, 1], [], []>} : vector<32x128xf32>, vector<128x128xf32>, vector<32x128xf32> -> vector<32x128xf32>
    %c0_3 = arith.constant 0 : index
    %c0_4 = arith.constant 0 : index
    %3 = vector.load %arg4[%c0_3, %c0_4] : memref<1x128xf32, #tpu.memory_space<vmem>>, vector<1x128xf32>
    %4 = vector.broadcast %3 : vector<1x128xf32> to vector<32x128xf32>
    %5 = arith.addf %2, %4 : vector<32x128xf32>
    %c0_5 = arith.constant 0 : index
    %c0_6 = arith.constant 0 : index
    %6 = vector.load %arg5[%c0_5, %c0_6] : memref<32x128xf32, #tpu.memory_space<vmem>>, vector<32x128xf32>
    tpu.vector_store %arg5[%c0_5, %c0_6], %5 {strides = array<i32>} : memref<32x128xf32, #tpu.memory_space<vmem>>, vector<32x128xf32>,
    return
  }
  func.func @transform_0(%arg0: i32, %arg1: i32) -> (i32, i32) {
    %c0_i32 = arith.constant 0 : i32
    %c0_i32_0 = arith.constant 0 : i32
    return %arg0, %c0_i32 : i32, i32
  }
  func.func @transform_1(%arg0: i32, %arg1: i32) -> (i32, i32) {
    %c0_i32 = arith.constant 0 : i32
    %c0_i32_0 = arith.constant 0 : i32
    return %c0_i32, %arg1 : i32, i32
  }
  func.func @transform_2(%arg0: i32, %arg1: i32) -> (i32, i32) {
    %c0_i32 = arith.constant 0 : i32
    %c0_i32_0 = arith.constant 0 : i32
    return %c0_i32, %arg1 : i32, i32
  }
  func.func @transform_3(%arg0: i32, %arg1: i32) -> (i32, i32) {
    %c0_i32 = arith.constant 0 : i32
    return %arg0, %arg1 : i32, i32
  }
}

</mosaic_0001>

<llo_original>
// kernel: tpu_custom_call.1
$region0: #{tpu_custom_call.1}
  #allocation0 [shape = 'u32[]', space=smem, size = 0x4, offset = 0x4, fixed_abs, tag = 'smem constant byte address 0x4 - core index']
  #allocation1 [shape = 'u32[72,128]{1,0:T(1,128)}', space=vmem, size = 0x9000, scoped, tag = 'internal scratch']
  %s0 = inlined_call_operand.hbm [shape: f32[32,128], index: 0, kind: input, shape index: {}]
  %s1 = inlined_call_operand.hbm [shape: f32[128,128], index: 1, kind: input, shape index: {}]
  %s2 = inlined_call_operand.vmem [shape: f32[1,128], index: 2, kind: input, shape index: {}]
  %s3 = inlined_call_operand.hbm [shape: f32[32,128], index: 3, kind: output, shape index: {}]
  %s4 = sld [smem:[#allocation0]]
  $region30: #{tpu_custom_call.1} parent=0
    _
  %s6 = ssub.s32 1, %s4
  %s7 = scalar_select 0, %s6, %s4
  $region1: #{tpu_custom_call.1} parent=0
    #allocation2 [shape = 'u8[16384]{0}', space=vmem, size = 0x4000, scoped, tag = 'input window, operand 0, single buffered']
    #allocation3 [shape = 's32[1]{0}', space=sflag, size = 0x4, scoped, tag = 'scoped memory for tpu_custom_call.1']
    #allocation4 [shape = 's32[1]{0}', space=sflag, size = 0x4, scoped, tag = 'scoped memory for tpu_custom_call.1']
    #allocation5 [shape = 'u8[65536]{0}', space=vmem, size = 0x10000, scoped, tag = 'input window, operand 1, single buffered']
    #allocation6 [shape = 's32[1]{0}', space=sflag, size = 0x4, scoped, tag = 'scoped memory for tpu_custom_call.1']
    #allocation7 [shape = 'u8[16384]{0}', space=vmem, size = 0x4000, scoped, tag = 'output window, operand 0, single buffered']
    %8 = vsyncpa [#allocation3], 0
    %9 = vsyncpa [#allocation6], 0
    %10 = vsyncpa [#allocation4], 0
    // Predicated region
    $region2: #{tpu_custom_call.1} parent=1 // pred_check
      _
    $region3: #{tpu_custom_call.1} parent=1 // pred_check_branch
      %12 = sbr.rel (0) target = $region5
    $region4: #{tpu_custom_call.1} parent=1 // pred_region
      %14 = vsyncadd [#allocation3], 0
      %s15 = sshll.u32 %s0, 4
      %s16 = int_to_ptr.hbm [resolvable:$true] %s15
      %s17 = sshll.u32 [#allocation2], 4
      %s18 = int_to_ptr.vmem [resolvable:$true] %s17
      %23 = dma.hbm_to_vmem [thread:$0]  %s16, 512, %s18, [#allocation3], 128, 128, 8
    $region5: #{tpu_custom_call.1} parent=1 // pred_fallthru
      _
    // Predicated region
    $region6: #{tpu_custom_call.1} parent=1 // pred_check
      _
    $region7: #{tpu_custom_call.1} parent=1 // pred_check_branch
      %25 = sbr.rel (0) target = $region9
    $region8: #{tpu_custom_call.1} parent=1 // pred_region
      %27 = vsyncadd [#allocation6], 0
      %s28 = sshll.u32 %s1, 4
      %s29 = int_to_ptr.hbm [resolvable:$true] %s28
      %s30 = sshll.u32 [#allocation5], 4
      %s31 = int_to_ptr.vmem [resolvable:$true] %s30
      %36 = dma.hbm_to_vmem [thread:$0]  %s29, 2048, %s31, [#allocation6], 128, 128, 8
    $region9: #{tpu_custom_call.1} parent=1 // pred_fallthru
      _
    // Predicated region
    $region10: #{tpu_custom_call.1} parent=1 // pred_check
      _
    $region11: #{tpu_custom_call.1} parent=1 // pred_check_branch
      %38 = sbr.rel (0) target = $region13
    $region12: #{tpu_custom_call.1} parent=1 // pred_region
      _
    $region13: #{tpu_custom_call.1} parent=1 // pred_fallthru
      _
    // Predicated region
    $region14: #{tpu_custom_call.1} parent=1 // pred_check
      _
    $region15: #{tpu_custom_call.1} parent=1 // pred_check_branch
      %40 = sbr.rel (0) target = $region17
    $region16: #{tpu_custom_call.1} parent=1 // pred_region
      %42 = dma.done [#allocation3], 512
    $region17: #{tpu_custom_call.1} parent=1 // pred_fallthru
      _
    // Predicated region
    $region18: #{tpu_custom_call.1} parent=1 // pred_check
      _
    $region19: #{tpu_custom_call.1} parent=1 // pred_check_branch
      %44 = sbr.rel (0) target = $region21
    $region20: #{tpu_custom_call.1} parent=1 // pred_region
      %46 = dma.done [#allocation6], 2048
    $region21: #{tpu_custom_call.1} parent=1 // pred_fallthru
      _
    %v47 = vld [vmem:[#allocation2] sm:$0xff]
    %v48 = vld [vmem:[#allocation2 + $0x8] sm:$0xff]
    %v49 = vld [vmem:[#allocation2 + $0x10] sm:$0xff]
    %v50 = vld [vmem:[#allocation2 + $0x18] sm:$0xff]
    %v51 = vld [vmem:[#allocation5] sm:$0xff]
    %v52 = vld [vmem:[#allocation5 + $0x8] sm:$0xff]
    %v53 = vld [vmem:[#allocation5 + $0x10] sm:$0xff]
    %v54 = vld [vmem:[#allocation5 + $0x18] sm:$0xff]
    %v55 = vld [vmem:[#allocation5 + $0x20] sm:$0xff]
    %v56 = vld [vmem:[#allocation5 + $0x28] sm:$0xff]
    %v57 = vld [vmem:[#allocation5 + $0x30] sm:$0xff]
    %v58 = vld [vmem:[#allocation5 + $0x38] sm:$0xff]
    %v59 = vld [vmem:[#allocation5 + $0x40] sm:$0xff]
    %v60 = vld [vmem:[#allocation5 + $0x48] sm:$0xff]
    %v61 = vld [vmem:[#allocation5 + $0x50] sm:$0xff]
    %v62 = vld [vmem:[#allocation5 + $0x58] sm:$0xff]
    %v63 = vld [vmem:[#allocation5 + $0x60] sm:$0xff]
    %v64 = vld [vmem:[#allocation5 + $0x68] sm:$0xff]
    %v65 = vld [vmem:[#allocation5 + $0x70] sm:$0xff]
    %v66 = vld [vmem:[#allocation5 + $0x78] sm:$0xff]
    %v67 = vld [vmem:[%s2] sm:$0x1]
    %v69 = vperm.slane %v67, 0
    %71 = vmatpush.msra.mxu0 %v66
    %72 = vmatpush.msra.mxu0 %v65
    %73 = vmatpush.msra.mxu0 %v64
    %74 = vmatpush.msra.mxu0 %v63
    %75 = vmatpush.msra.mxu0 %v62
    %76 = vmatpush.msra.mxu0 %v61
    %77 = vmatpush.msra.mxu0 %v60
    %78 = vmatpush.msra.mxu0 %v59
    %79 = vmatpush.msra.mxu0 %v58
    %80 = vmatpush.msra.mxu0 %v57
    %81 = vmatpush.msra.mxu0 %v56
    %82 = vmatpush.msra.mxu0 %v55
    %83 = vmatpush.msra.mxu0 %v54
    %84 = vmatpush.msra.mxu0 %v53
    %85 = vmatpush.msra.mxu0 %v52
    %86 = vmatpush.msra.mxu0 %v51
    %87 = vmatmul.f32.gmra.mxu0 %v47
    %v88 = vpop.f32.mrf.mxu0
    %v89 = vadd.f32 %v69, %v88
    %90 = vmatmul.f32.gmra.mxu0 %v48
    %v91 = vpop.f32.mrf.mxu0
    %v92 = vadd.f32 %v69, %v91
    %93 = vmatmul.f32.gmra.mxu0 %v49
    %v94 = vpop.f32.mrf.mxu0
    %v95 = vadd.f32 %v69, %v94
    %96 = vmatmul.f32.gmra.mxu0 %v50
    %v97 = vpop.f32.mrf.mxu0
    %v98 = vadd.f32 %v69, %v97
    %99 = vdwg.mxu0
    %100 = vst [vmem:[#allocation7] sm:$0xff] %v89
    %101 = vst [vmem:[#allocation7 + $0x8] sm:$0xff] %v92
    %102 = vst [vmem:[#allocation7 + $0x10] sm:$0xff] %v95
    %103 = vst [vmem:[#allocation7 + $0x18] sm:$0xff] %v98
    // Predicated region
    $region22: #{tpu_custom_call.1} parent=1 // pred_check
      _
    $region23: #{tpu_custom_call.1} parent=1 // pred_check_branch
      %105 = sbr.rel (0) target = $region25
    $region24: #{tpu_custom_call.1} parent=1 // pred_region
      %107 = vsyncadd [#allocation4], 0
      %s108 = sshll.u32 [#allocation7], 4
      %s109 = int_to_ptr.vmem [resolvable:$true] %s108
      %s110 = sshll.u32 %s3, 4
      %s111 = int_to_ptr.hbm [resolvable:$true] %s110
      %116 = dma.vmem_to_hbm [thread:$0]  %s109, 512, %s111, [#allocation4], 128, 128, 8
    $region25: #{tpu_custom_call.1} parent=1 // pred_fallthru
      _
    // Predicated region
    $region26: #{tpu_custom_call.1} parent=1 // pred_check
      _
    $region27: #{tpu_custom_call.1} parent=1 // pred_check_branch
      %118 = sbr.rel (0) target = $region29
    $region28: #{tpu_custom_call.1} parent=1 // pred_region
      %120 = dma.done [#allocation4], 512
    $region29: #{tpu_custom_call.1} parent=1 // pred_fallthru
      _
    %121 = vsyncpa [#allocation3], 1
    %122 = vsyncpa [#allocation6], 1
    %123 = vsyncpa [#allocation4], 1

</llo_original>
